<compile_context>
chip_gen: v7x
topology: tpu7x:2x2x1
jax: 0.10.0
libtpu: 0.0.40
codegen_flags: <defaults>
</compile_context>

<pallas_src>
import jax
import jax.numpy as jnp
from jax.experimental import pallas as pl
from jax.experimental.pallas import tpu as pltpu


def _mlp_kernel(x_ref, a_ref, w1x_ref, w1a_ref, b1_ref, w2_ref, b2_ref, o_ref):
    # Fused (x, a) -> Linear -> ReLU -> Linear on one (TB, .) batch tile.
    # f32 end-to-end; all matmuls accumulate in f32 on the MXU.
    x = x_ref[...]                                              # (TB, X) f32
    a = a_ref[...]                                              # (TB, A) f32
    # h = [x | a] @ W1 + b1 with W1 pre-split -> no concat needed anywhere.
    h = jnp.dot(x, w1x_ref[...], preferred_element_type=jnp.float32)
    h += jnp.dot(a, w1a_ref[...], preferred_element_type=jnp.float32)
    h += b1_ref[...]                                            # (1, H) bcast
    h = jnp.maximum(h, 0.0)                                     # ReLU on VPU
    out = jnp.dot(h, w2_ref[...], preferred_element_type=jnp.float32)
    out += b2_ref[...]                                          # (1, X) bcast
    o_ref[...] = out.astype(o_ref.dtype)


def _choose_batch_tile(B, tile_b):
    """Pick a batch tile TB (multiple of 8 when tiling, or the full batch)."""
    if B <= tile_b:
        return B                          # single block, full-extent (exempt
                                          # from the 8-sublane divisibility rule)
    nblocks = -(-B // tile_b)             # cdiv
    if nblocks % 2:
        nblocks += 1                      # even block count -> balanced across
                                          # both TensorCores on v7x
    tb = -(-B // nblocks)                 # cdiv
    tb = ((tb + 7) // 8) * 8              # sublane rule
    return min(tb, tile_b)


def forward_model_pallas(x_t, a_t, w1x, w1a, b1, w2, b2, *, tile_b=4096):
    """Fused MLP forward.  x_t: (B, X), a_t: (B, A); weights pre-transposed."""
    B, X = x_t.shape
    A = a_t.shape[1]
    H = w1x.shape[1]
    assert w1a.shape == (A, H) and w2.shape == (H, X)
    assert b1.shape == (1, H) and b2.shape == (1, X)

    # Batch tile: amortizes per-grid-step overhead; ragged last block is handled
    # by pl.cdiv + blocked specs (row-independent compute, padding is benign and
    # masked on writeback -- do not reduce over the batch axis in-kernel).
    TB = _choose_batch_tile(B, tile_b)
    grid = (pl.cdiv(B, TB),)

    act_spec = lambda d: pl.BlockSpec((TB, d), lambda i: (i, 0))
    fixed = lambda shp: pl.BlockSpec(shp, lambda i: (0, 0))

    flops = 2 * B * ((X + A) * H + H * X)
    bytes_accessed = (
        x_t.size * x_t.dtype.itemsize
        + a_t.size * a_t.dtype.itemsize
        + sum(w.size * w.dtype.itemsize for w in (w1x, w1a, b1, w2, b2))
        + B * X * 4
    )

    return pl.pallas_call(
        _mlp_kernel,
        out_shape=jax.ShapeDtypeStruct((B, X), jnp.float32),
        grid_spec=pltpu.PrefetchScalarGridSpec(
            num_scalar_prefetch=0,
            grid=grid,
            in_specs=[
                act_spec(X),            # x tile        (TB, X)
                act_spec(A),            # a tile        (TB, A)
                fixed(w1x.shape),       # w1x           (X, H)   VMEM-resident
                fixed(w1a.shape),       # w1a           (A, H)   VMEM-resident
                fixed(b1.shape),        # b1            (1, H)   VMEM-resident
                fixed(w2.shape),        # w2            (H, X)   VMEM-resident
                fixed(b2.shape),        # b2            (1, X)   VMEM-resident
            ],
            out_specs=act_spec(X),      # out tile      (TB, X)
        ),
        compiler_params=pltpu.CompilerParams(
            dimension_semantics=("parallel",),   # shard batch across TCs (v7x)
        ),
        cost_estimate=pl.CostEstimate(
            flops=flops, transcendentals=0, bytes_accessed=bytes_accessed),
    )(x_t, a_t, w1x, w1a, b1, w2, b2)


class ForwardModelPallas:
    """JAX/Pallas port of ForwardModel with hidden_dim=(64,), f32 end-to-end."""

    def __init__(self, x_dim, a_dim, hidden_dim=(64,), key=None, tile_b=4096):
        assert len(x_dim) == 1 and len(a_dim) == 1
        assert len(hidden_dim) == 1, "kernel is fused for a single hidden layer"
        self.x_dim = x_dim
        self.a_dim = a_dim
        self.tile_b = tile_b
        if key is None:
            key = jax.random.PRNGKey(0)

        X, A, H = x_dim[0], a_dim[0], hidden_dim[0]
        d_in = X + A

        # Deterministic init mimicking nn.Linear default:
        # U(-1/sqrt(fan_in), 1/sqrt(fan_in)) for both weight and bias.
        key, k1w, k1b, k2w, k2b = jax.random.split(key, 5)
        bound1 = 1.0 / float(jnp.sqrt(jnp.float32(d_in)))
        bound2 = 1.0 / float(jnp.sqrt(jnp.float32(H)))

        # Stored as (d_in, d_out) == W^T relative to PyTorch's (d_out, d_in).
        w1 = jax.random.uniform(k1w, (d_in, H), jnp.float32, -bound1, bound1)
        b1 = jax.random.uniform(k1b, (1, H), jnp.float32, -bound1, bound1)
        w2 = jax.random.uniform(k2w, (H, X), jnp.float32, -bound2, bound2)
        b2 = jax.random.uniform(k2b, (1, X), jnp.float32, -bound2, bound2)

        # Split W1 so the kernel never needs the (B, X+A) concat.  Everything
        # stays f32: the kernel is memory-bound, so bf16 would only add casts.
        self.w1x = w1[:X]
        self.w1a = w1[X:]
        self.b1 = b1
        self.w2 = w2
        self.b2 = b2

    def _promote(self, v, required_dim, name):
        # apply_tensor_constraints glue: promote a 1-D feature vector to a
        # (1, D) batch; anything else with a mismatched feature dim is an error.
        v = jnp.asarray(v, jnp.float32)
        if v.ndim == 1:
            if v.shape[0] != required_dim:
                raise ValueError(
                    f"{name}: expected feature dim {required_dim}, got {v.shape}")
            v = v[None, :]
        assert v.shape[-1] == required_dim
        return v

    def __call__(self, x_t, a_t):
        x_t = self._promote(x_t, self.x_dim[0], "x_t")
        a_t = self._promote(a_t, self.a_dim[0], "a_t")
        assert x_t.shape[0] == a_t.shape[0]
        return forward_model_pallas(x_t, a_t,
                                    self.w1x, self.w1a, self.b1,
                                    self.w2, self.b2,
                                    tile_b=self.tile_b)

    def reference(self, x_t, a_t):
        """Pure-JAX reference (and the recommended path for tiny batches)."""
        x_t = self._promote(x_t, self.x_dim[0], "x_t")
        a_t = self._promote(a_t, self.a_dim[0], "a_t")
        xa = jnp.concatenate([x_t, a_t], axis=1)
        w1 = jnp.concatenate([self.w1x, self.w1a], axis=0)
        h = jnp.maximum(
            jnp.dot(xa, w1, precision=jax.lax.Precision.HIGHEST) + self.b1, 0.0)
        return jnp.dot(h, self.w2, precision=jax.lax.Precision.HIGHEST) + self.b2


if __name__ == "__main__":
    key = jax.random.PRNGKey(0)
    B, X, A, H = 64, 16, 8, 64   # batch, state dim, action dim, hidden dim

    model = ForwardModelPallas((X,), (A,), hidden_dim=(H,), key=key)

    key, kx, ka = jax.random.split(key, 3)
    x_t = jax.random.normal(kx, (B, X), jnp.float32)
    a_t = jax.random.normal(ka, (B, A), jnp.float32)

    x_tp1 = model(x_t, a_t)
    jax.block_until_ready(x_tp1)

    ref = model.reference(x_t, a_t)

    assert x_tp1.shape == (B, X)
    assert x_tp1.dtype == jnp.float32
    assert jnp.allclose(x_tp1, ref, atol=1e-3, rtol=1e-3)

    print("KERNEL_OK")
</pallas_src>

<mosaic_0001>
module attributes {stable_mosaic.version = 11 : i64} {
  func.func @_mlp_kernel(%arg0: i32, %arg1: memref<64x16xf32, #tpu.memory_space<vmem>>, %arg2: memref<64x8xf32, #tpu.memory_space<vmem>>, %arg3: memref<16x64xf32, #tpu.memory_space<vmem>>, %arg4: memref<8x64xf32, #tpu.memory_space<vmem>>, %arg5: memref<1x64xf32, #tpu.memory_space<vmem>>, %arg6: memref<64x16xf32, #tpu.memory_space<vmem>>, %arg7: memref<1x16xf32, #tpu.memory_space<vmem>>, %arg8: memref<64x16xf32, #tpu.memory_space<vmem>>) attributes {dimension_semantics = [#tpu.dimension_semantics<parallel>], iteration_bounds = array<i64: 1>, scalar_prefetch = 0 : i64, scratch_operands = 0 : i64, tpu.core_type = #tpu.core_type<tc>, window_params = [{transform_indices = @transform_0, window_bounds = array<i64: 64, 16>}, {transform_indices = @transform_1, window_bounds = array<i64: 64, 8>}, {pipeline_mode = #tpu.pipeline_mode<synchronous>, transform_indices = @transform_2, window_bounds = array<i64: 16, 64>}, {pipeline_mode = #tpu.pipeline_mode<synchronous>, transform_indices = @transform_3, window_bounds = array<i64: 8, 64>}, {pipeline_mode = #tpu.pipeline_mode<synchronous>, transform_indices = @transform_4, window_bounds = array<i64: 1, 64>}, {pipeline_mode = #tpu.pipeline_mode<synchronous>, transform_indices = @transform_5, window_bounds = array<i64: 64, 16>}, {pipeline_mode = #tpu.pipeline_mode<synchronous>, transform_indices = @transform_6, window_bounds = array<i64: 1, 16>}, {transform_indices = @transform_7, window_bounds = array<i64: 64, 16>}]} {
    %c0 = arith.constant 0 : index
    %c0_0 = arith.constant 0 : index
    %0 = vector.load %arg1[%c0, %c0_0] : memref<64x16xf32, #tpu.memory_space<vmem>>, vector<64x16xf32>
    %c0_1 = arith.constant 0 : index
    %c0_2 = arith.constant 0 : index
    %1 = vector.load %arg2[%c0_1, %c0_2] : memref<64x8xf32, #tpu.memory_space<vmem>>, vector<64x8xf32>
    %c0_3 = arith.constant 0 : index
    %c0_4 = arith.constant 0 : index
    %2 = vector.load %arg3[%c0_3, %c0_4] : memref<16x64xf32, #tpu.memory_space<vmem>>, vector<16x64xf32>
    %cst = arith.constant dense<0.000000e+00> : vector<64x64xf32>
    %3 = tpu.matmul %0, %2, %cst {dimension_numbers = #tpu.dot_dimension_numbers<[1], [0], [0], [1], [0, 0, 1, 1], [], []>} : vector<64x16xf32>, vector<16x64xf32>, vector<64x64xf32> -> vector<64x64xf32>
    %c0_5 = arith.constant 0 : index
    %c0_6 = arith.constant 0 : index
    %4 = vector.load %arg4[%c0_5, %c0_6] : memref<8x64xf32, #tpu.memory_space<vmem>>, vector<8x64xf32>
    %cst_7 = arith.constant dense<0.000000e+00> : vector<64x64xf32>
    %5 = tpu.matmul %1, %4, %cst_7 {dimension_numbers = #tpu.dot_dimension_numbers<[1], [0], [0], [1], [0, 0, 1, 1], [], []>} : vector<64x8xf32>, vector<8x64xf32>, vector<64x64xf32> -> vector<64x64xf32>
    %6 = arith.addf %3, %5 : vector<64x64xf32>
    %c0_8 = arith.constant 0 : index
    %c0_9 = arith.constant 0 : index
    %7 = vector.load %arg5[%c0_8, %c0_9] : memref<1x64xf32, #tpu.memory_space<vmem>>, vector<1x64xf32>
    %8 = vector.broadcast %7 : vector<1x64xf32> to vector<64x64xf32>
    %9 = arith.addf %6, %8 : vector<64x64xf32>
    %cst_10 = arith.constant 0.000000e+00 : f32
    %10 = vector.broadcast %cst_10 : f32 to vector<64x64xf32>
    %11 = arith.maximumf %9, %10 : vector<64x64xf32>
    %c0_11 = arith.constant 0 : index
    %c0_12 = arith.constant 0 : index
    %12 = vector.load %arg6[%c0_11, %c0_12] : memref<64x16xf32, #tpu.memory_space<vmem>>, vector<64x16xf32>
    %cst_13 = arith.constant dense<0.000000e+00> : vector<64x16xf32>
    %13 = tpu.matmul %11, %12, %cst_13 {dimension_numbers = #tpu.dot_dimension_numbers<[1], [0], [0], [1], [0, 0, 1, 1], [], []>} : vector<64x64xf32>, vector<64x16xf32>, vector<64x16xf32> -> vector<64x16xf32>
    %c0_14 = arith.constant 0 : index
    %c0_15 = arith.constant 0 : index
    %14 = vector.load %arg7[%c0_14, %c0_15] : memref<1x16xf32, #tpu.memory_space<vmem>>, vector<1x16xf32>
    %15 = vector.broadcast %14 : vector<1x16xf32> to vector<64x16xf32>
    %16 = arith.addf %13, %15 : vector<64x16xf32>
    %c0_16 = arith.constant 0 : index
    %c0_17 = arith.constant 0 : index
    %17 = vector.load %arg8[%c0_16, %c0_17] : memref<64x16xf32, #tpu.memory_space<vmem>>, vector<64x16xf32>
    tpu.vector_store %arg8[%c0_16, %c0_17], %16 {strides = array<i32>} : memref<64x16xf32, #tpu.memory_space<vmem>>, vector<64x16xf32>,
    return
  }
  func.func @transform_0(%arg0: i32) -> (i32, i32) {
    %c0_i32 = arith.constant 0 : i32
    %c0_i32_0 = arith.constant 0 : i32
    return %arg0, %c0_i32 : i32, i32
  }
  func.func @transform_1(%arg0: i32) -> (i32, i32) {
    %c0_i32 = arith.constant 0 : i32
    %c0_i32_0 = arith.constant 0 : i32
    return %arg0, %c0_i32 : i32, i32
  }
  func.func @transform_2(%arg0: i32) -> (i32, i32) {
    %c0_i32 = arith.constant 0 : i32
    %c0_i32_0 = arith.constant 0 : i32
    %c0_i32_1 = arith.constant 0 : i32
    return %c0_i32, %c0_i32_0 : i32, i32
  }
  func.func @transform_3(%arg0: i32) -> (i32, i32) {
    %c0_i32 = arith.constant 0 : i32
    %c0_i32_0 = arith.constant 0 : i32
    %c0_i32_1 = arith.constant 0 : i32
    return %c0_i32, %c0_i32_0 : i32, i32
  }
  func.func @transform_4(%arg0: i32) -> (i32, i32) {
    %c0_i32 = arith.constant 0 : i32
    %c0_i32_0 = arith.constant 0 : i32
    %c0_i32_1 = arith.constant 0 : i32
    return %c0_i32, %c0_i32_0 : i32, i32
  }
  func.func @transform_5(%arg0: i32) -> (i32, i32) {
    %c0_i32 = arith.constant 0 : i32
    %c0_i32_0 = arith.constant 0 : i32
    %c0_i32_1 = arith.constant 0 : i32
    return %c0_i32, %c0_i32_0 : i32, i32
  }
  func.func @transform_6(%arg0: i32) -> (i32, i32) {
    %c0_i32 = arith.constant 0 : i32
    %c0_i32_0 = arith.constant 0 : i32
    %c0_i32_1 = arith.constant 0 : i32
    return %c0_i32, %c0_i32_0 : i32, i32
  }
  func.func @transform_7(%arg0: i32) -> (i32, i32) {
    %c0_i32 = arith.constant 0 : i32
    %c0_i32_0 = arith.constant 0 : i32
    return %arg0, %c0_i32 : i32, i32
  }
}

</mosaic_0001>

<llo_original>
// kernel: tpu_custom_call.1
$region0: #{tpu_custom_call.1}
  #allocation0 [shape = 'u32[]', space=smem, size = 0x4, offset = 0x4, fixed_abs, tag = 'smem constant byte address 0x4 - core index']
  #allocation1 [shape = 'u32[144,128]{1,0:T(1,128)}', space=vmem, size = 0x12000, scoped, tag = 'internal scratch']
  %s0 = inlined_call_operand.vmem [shape: f32[64,16], index: 0, kind: input, shape index: {}]
  %s1 = inlined_call_operand.vmem [shape: f32[64,8], index: 1, kind: input, shape index: {}]
  %s2 = inlined_call_operand.vmem [shape: f32[16,64], index: 2, kind: input, shape index: {}]
  %s3 = inlined_call_operand.vmem [shape: f32[8,64], index: 3, kind: input, shape index: {}]
  %s4 = inlined_call_operand.vmem [shape: f32[1,64], index: 4, kind: input, shape index: {}]
  %s5 = inlined_call_operand.vmem [shape: f32[64,16], index: 5, kind: input, shape index: {}]
  %s6 = inlined_call_operand.vmem [shape: f32[1,16], index: 6, kind: input, shape index: {}]
  %s7 = inlined_call_operand.vmem [shape: f32[64,16], index: 7, kind: output, shape index: {}]
  %s8 = sld [smem:[#allocation0]]
  $region38: #{tpu_custom_call.1} parent=0
    _
  %s10 = ssub.s32 1, %s8
  %s11 = scalar_select 0, %s10, %s8
  // Predicated region
  $region2: #{tpu_custom_call.1} parent=0 // pred_check
    _
  $region3: #{tpu_custom_call.1} parent=0 // pred_check_branch
    %13 = sbr.rel (0) target = $region5
  $region4: #{tpu_custom_call.1} parent=0 // pred_region
    _
  $region5: #{tpu_custom_call.1} parent=0 // pred_fallthru
    _
  // Predicated region
  $region6: #{tpu_custom_call.1} parent=0 // pred_check
    _
  $region7: #{tpu_custom_call.1} parent=0 // pred_check_branch
    %15 = sbr.rel (0) target = $region9
  $region8: #{tpu_custom_call.1} parent=0 // pred_region
    _
  $region9: #{tpu_custom_call.1} parent=0 // pred_fallthru
    _
  // Predicated region
  $region10: #{tpu_custom_call.1} parent=0 // pred_check
    _
  $region11: #{tpu_custom_call.1} parent=0 // pred_check_branch
    %17 = sbr.rel (0) target = $region13
  $region12: #{tpu_custom_call.1} parent=0 // pred_region
    _
  $region13: #{tpu_custom_call.1} parent=0 // pred_fallthru
    _
  // Predicated region
  $region14: #{tpu_custom_call.1} parent=0 // pred_check
    _
  $region15: #{tpu_custom_call.1} parent=0 // pred_check_branch
    %19 = sbr.rel (0) target = $region17
  $region16: #{tpu_custom_call.1} parent=0 // pred_region
    _
  $region17: #{tpu_custom_call.1} parent=0 // pred_fallthru
    _
  // Predicated region
  $region18: #{tpu_custom_call.1} parent=0 // pred_check
    _
  $region19: #{tpu_custom_call.1} parent=0 // pred_check_branch
    %21 = sbr.rel (0) target = $region21
  $region20: #{tpu_custom_call.1} parent=0 // pred_region
    _
  $region21: #{tpu_custom_call.1} parent=0 // pred_fallthru
    _
  // Predicated region
  $region22: #{tpu_custom_call.1} parent=0 // pred_check
    _
  $region23: #{tpu_custom_call.1} parent=0 // pred_check_branch
    %23 = sbr.rel (0) target = $region25
  $region24: #{tpu_custom_call.1} parent=0 // pred_region
    _
  $region25: #{tpu_custom_call.1} parent=0 // pred_fallthru
    _
  // Predicated region
  $region26: #{tpu_custom_call.1} parent=0 // pred_check
    _
  $region27: #{tpu_custom_call.1} parent=0 // pred_check_branch
    %25 = sbr.rel (0) target = $region29
  $region28: #{tpu_custom_call.1} parent=0 // pred_region
    _
  $region29: #{tpu_custom_call.1} parent=0 // pred_fallthru
    _
  %v26 = vld [vmem:[%s0] sm:$0xff]
  %v27 = vld [vmem:[%s0 + $0x8] sm:$0xff]
  %v28 = vld [vmem:[%s0 + $0x10] sm:$0xff]
  %v29 = vld [vmem:[%s0 + $0x18] sm:$0xff]
  %v30 = vld [vmem:[%s0 + $0x20] sm:$0xff]
  %v31 = vld [vmem:[%s0 + $0x28] sm:$0xff]
  %v32 = vld [vmem:[%s0 + $0x30] sm:$0xff]
  %v33 = vld [vmem:[%s0 + $0x38] sm:$0xff]
  %v34 = vld [vmem:[%s1] sm:$0xff]
  %v35 = vld [vmem:[%s1 + $0x8] sm:$0xff]
  %v36 = vld [vmem:[%s1 + $0x10] sm:$0xff]
  %v37 = vld [vmem:[%s1 + $0x18] sm:$0xff]
  %v38 = vld [vmem:[%s1 + $0x20] sm:$0xff]
  %v39 = vld [vmem:[%s1 + $0x28] sm:$0xff]
  %v40 = vld [vmem:[%s1 + $0x30] sm:$0xff]
  %v41 = vld [vmem:[%s1 + $0x38] sm:$0xff]
  %v42 = vld [vmem:[%s2] sm:$0xff]
  %v43 = vld [vmem:[%s2 + $0x8] sm:$0xff]
  %v44 = vld [vmem:[%s3] sm:$0xff]
  %vm45 = vcmask 64512
  %v47 = vsel %vm45, %v34, 0
  %v50 = vsel %vm45, %v35, 0
  %v53 = vsel %vm45, %v36, 0
  %v56 = vsel %vm45, %v37, 0
  %v59 = vsel %vm45, %v38, 0
  %v62 = vsel %vm45, %v39, 0
  %v65 = vsel %vm45, %v40, 0
  %v68 = vsel %vm45, %v41, 0
  %70 = vmatprep.subr.mxu0 0.0
  %71 = vmatpush1.msra.mxu0 %v44
  %72 = vmatprep.subr.mxu0 0.0
  %73 = vmatpush1.msra.mxu0 0.0
  %74 = vmatprep.subr.mxu0 0.0
  %75 = vmatpush1.msra.mxu0 0.0
  %76 = vmatprep.subr.mxu0 0.0
  %77 = vmatpush1.msra.mxu0 0.0
  %78 = vmatprep.subr.mxu0 0.0
  %79 = vmatpush1.msra.mxu0 0.0
  %80 = vmatprep.subr.mxu0 0.0
  %81 = vmatpush1.msra.mxu0 0.0
  %82 = vmatprep.subr.mxu0 0.0
  %83 = vmatpush1.msra.mxu0 0.0
  %84 = vmatprep.subr.mxu0 0.0
  %85 = vmatpush1.msra.mxu0 0.0
  %86 = vmatprep.subr.mxu0 0.0
  %87 = vmatpush1.msra.mxu0 0.0
  %88 = vmatprep.subr.mxu0 0.0
  %89 = vmatpush1.msra.mxu0 0.0
  %90 = vmatprep.subr.mxu0 0.0
  %91 = vmatpush1.msra.mxu0 0.0
  %92 = vmatprep.subr.mxu0 0.0
  %93 = vmatpush1.msra.mxu0 0.0
  %94 = vmatprep.subr.mxu0 0.0
  %95 = vmatpush1.msra.mxu0 0.0
  %96 = vmatprep.subr.mxu0 0.0
  %97 = vmatpush1.msra.mxu0 0.0
  %98 = vmatprep.subr.mxu0 0.0
  %99 = vmatpush1.msra.mxu0 0.0
  %100 = vmatprep.subr.mxu0 0.0
  %101 = vmatpush1.msra.mxu0 0.0
  %102 = vmatprep.subr.mxu0 0.0
  %103 = vmatpush1.msra.mxu0 0.0
  %104 = vmatprep.subr.mxu0 0.0
  %105 = vmatpush1.msra.mxu0 0.0
  %106 = vmatprep.subr.mxu0 0.0
  %107 = vmatpush1.msra.mxu0 0.0
  %108 = vmatprep.subr.mxu0 0.0
  %109 = vmatpush1.msra.mxu0 0.0
  %110 = vmatprep.subr.mxu0 0.0
  %111 = vmatpush1.msra.mxu0 0.0
  %112 = vmatprep.subr.mxu0 0.0
  %113 = vmatpush1.msra.mxu0 0.0
  %114 = vmatprep.subr.mxu0 0.0
  %115 = vmatpush1.msra.mxu0 0.0
  %116 = vmatprep.subr.mxu0 0.0
  %117 = vmatpush1.msra.mxu0 0.0
  %118 = vmatprep.subr.mxu0 0.0
  %119 = vmatpush1.msra.mxu0 0.0
  %120 = vmatprep.subr.mxu0 0.0
  %121 = vmatpush1.msra.mxu0 0.0
  %122 = vmatprep.subr.mxu0 0.0
  %123 = vmatpush1.msra.mxu0 0.0
  %124 = vmatprep.subr.mxu0 0.0
  %125 = vmatpush1.msra.mxu0 0.0
  %126 = vmatprep.subr.mxu0 0.0
  %127 = vmatpush1.msra.mxu0 0.0
  %128 = vmatprep.subr.mxu0 0.0
  %129 = vmatpush1.msra.mxu0 0.0
  %130 = vmatprep.subr.mxu0 0.0
  %131 = vmatpush1.msra.mxu0 0.0
  %132 = vmatprep.subr.mxu0 0.0
  %133 = vmatpush1.msra.mxu0 0.0
  %134 = vmatprep.mubr.f32.mxu0 0.0
  %135 = vmatmul.mubr.f32.gmra.mrb[0].mxu0 %v47
  %v136 = vpop.f32.mrb[0].mxu0
  %v137 = vadd.f32 0.0, %v136
  %v138 = vpop.f32.mrb[0].mxu0
  %139 = vmatprep.mubr.f32.mxu0 0.0
  %140 = vmatmul.mubr.f32.gmra.mrb[0].mxu0 %v50
  %v141 = vpop.f32.mrb[0].mxu0
  %v142 = vadd.f32 0.0, %v141
  %v143 = vpop.f32.mrb[0].mxu0
  %144 = vmatprep.mubr.f32.mxu0 0.0
  %145 = vmatmul.mubr.f32.gmra.mrb[0].mxu0 %v53
  %v146 = vpop.f32.mrb[0].mxu0
  %v147 = vadd.f32 0.0, %v146
  %v148 = vpop.f32.mrb[0].mxu0
  %149 = vmatprep.mubr.f32.mxu0 0.0
  %150 = vmatmul.mubr.f32.gmra.mrb[0].mxu0 %v56
  %v151 = vpop.f32.mrb[0].mxu0
  %v152 = vadd.f32 0.0, %v151
  %v153 = vpop.f32.mrb[0].mxu0
  %154 = vmatprep.mubr.f32.mxu0 0.0
  %155 = vmatmul.mubr.f32.gmra.mrb[0].mxu0 %v59
  %v156 = vpop.f32.mrb[0].mxu0
  %v157 = vadd.f32 0.0, %v156
  %v158 = vpop.f32.mrb[0].mxu0
  %159 = vmatprep.mubr.f32.mxu0 0.0
  %160 = vmatmul.mubr.f32.gmra.mrb[0].mxu0 %v62
  %v161 = vpop.f32.mrb[0].mxu0
  %v162 = vadd.f32 0.0, %v161
  %v163 = vpop.f32.mrb[0].mxu0
  %164 = vmatprep.mubr.f32.mxu0 0.0
  %165 = vmatmul.mubr.f32.gmra.mrb[0].mxu0 %v65
  %v166 = vpop.f32.mrb[0].mxu0
  %v167 = vadd.f32 0.0, %v166
  %v168 = vpop.f32.mrb[0].mxu0
  %169 = vmatprep.mubr.f32.mxu0 0.0
  %170 = vmatmul.mubr.f32.gmra.mrb[0].mxu0 %v68
  %v171 = vpop.f32.mrb[0].mxu0
  %v172 = vadd.f32 0.0, %v171
  %v173 = vpop.f32.mrb[0].mxu0
  %174 = vdwg.mxu0
  %vm175 = vcmask 130048
  %v177 = vsel %vm175, %v26, 0
  %v180 = vsel %vm175, %v27, 0
  %v183 = vsel %vm175, %v28, 0
  %v186 = vsel %vm175, %v29, 0
  %v189 = vsel %vm175, %v30, 0
  %v192 = vsel %vm175, %v31, 0
  %v195 = vsel %vm175, %v32, 0
  %v198 = vsel %vm175, %v33, 0
  %200 = vmatprep.subr.mxu0 0.0
  %201 = vmatpush1.msra.mxu0 %v42
  %202 = vmatprep.subr.mxu0 0.0
  %203 = vmatpush1.msra.mxu0 %v43
  %204 = vmatprep.subr.mxu0 0.0
  %205 = vmatpush1.msra.mxu0 0.0
  %206 = vmatprep.subr.mxu0 0.0
  %207 = vmatpush1.msra.mxu0 0.0
  %208 = vmatprep.subr.mxu0 0.0
  %209 = vmatpush1.msra.mxu0 0.0
  %210 = vmatprep.subr.mxu0 0.0
  %211 = vmatpush1.msra.mxu0 0.0
  %212 = vmatprep.subr.mxu0 0.0
  %213 = vmatpush1.msra.mxu0 0.0
  %214 = vmatprep.subr.mxu0 0.0
  %215 = vmatpush1.msra.mxu0 0.0
  %216 = vmatprep.subr.mxu0 0.0
  %217 = vmatpush1.msra.mxu0 0.0
  %218 = vmatprep.subr.mxu0 0.0
  %219 = vmatpush1.msra.mxu0 0.0
  %220 = vmatprep.subr.mxu0 0.0
  %221 = vmatpush1.msra.mxu0 0.0
  %222 = vmatprep.subr.mxu0 0.0
  %223 = vmatpush1.msra.mxu0 0.0
  %224 = vmatprep.subr.mxu0 0.0
  %225 = vmatpush1.msra.mxu0 0.0
  %226 = vmatprep.subr.mxu0 0.0
  %227 = vmatpush1.msra.mxu0 0.0
  %228 = vmatprep.subr.mxu0 0.0
  %229 = vmatpush1.msra.mxu0 0.0
  %230 = vmatprep.subr.mxu0 0.0
  %231 = vmatpush1.msra.mxu0 0.0
  %232 = vmatprep.subr.mxu0 0.0
  %233 = vmatpush1.msra.mxu0 0.0
  %234 = vmatprep.subr.mxu0 0.0
  %235 = vmatpush1.msra.mxu0 0.0
  %236 = vmatprep.subr.mxu0 0.0
  %237 = vmatpush1.msra.mxu0 0.0
  %238 = vmatprep.subr.mxu0 0.0
  %239 = vmatpush1.msra.mxu0 0.0
  %240 = vmatprep.subr.mxu0 0.0
  %241 = vmatpush1.msra.mxu0 0.0
  %242 = vmatprep.subr.mxu0 0.0
  %243 = vmatpush1.msra.mxu0 0.0
  %244 = vmatprep.subr.mxu0 0.0
  %245 = vmatpush1.msra.mxu0 0.0
  %246 = vmatprep.subr.mxu0 0.0
  %247 = vmatpush1.msra.mxu0 0.0
  %248 = vmatprep.subr.mxu0 0.0
  %249 = vmatpush1.msra.mxu0 0.0
  %250 = vmatprep.subr.mxu0 0.0
  %251 = vmatpush1.msra.mxu0 0.0
  %252 = vmatprep.subr.mxu0 0.0
  %253 = vmatpush1.msra.mxu0 0.0
  %254 = vmatprep.subr.mxu0 0.0
  %255 = vmatpush1.msra.mxu0 0.0
  %256 = vmatprep.subr.mxu0 0.0
  %257 = vmatpush1.msra.mxu0 0.0
  %258 = vmatprep.subr.mxu0 0.0
  %259 = vmatpush1.msra.mxu0 0.0
  %260 = vmatprep.subr.mxu0 0.0
  %261 = vmatpush1.msra.mxu0 0.0
  %262 = vmatprep.subr.mxu0 0.0
  %263 = vmatpush1.msra.mxu0 0.0
  %264 = vmatprep.mubr.f32.mxu0 0.0
  %265 = vmatmul.mubr.f32.gmra.mrb[0].mxu0 %v177
  %v266 = vpop.f32.mrb[0].mxu0
  %v267 = vadd.f32 %v137, %v266
  %v268 = vpop.f32.mrb[0].mxu0
  %269 = vmatprep.mubr.f32.mxu0 0.0
  %270 = vmatmul.mubr.f32.gmra.mrb[0].mxu0 %v180
  %v271 = vpop.f32.mrb[0].mxu0
  %v272 = vadd.f32 %v142, %v271
  %v273 = vpop.f32.mrb[0].mxu0
  %274 = vmatprep.mubr.f32.mxu0 0.0
  %275 = vmatmul.mubr.f32.gmra.mrb[0].mxu0 %v183
  %v276 = vpop.f32.mrb[0].mxu0
  %v277 = vadd.f32 %v147, %v276
  %v278 = vpop.f32.mrb[0].mxu0
  %279 = vmatprep.mubr.f32.mxu0 0.0
  %280 = vmatmul.mubr.f32.gmra.mrb[0].mxu0 %v186
  %v281 = vpop.f32.mrb[0].mxu0
  %v282 = vadd.f32 %v152, %v281
  %v283 = vpop.f32.mrb[0].mxu0
  %284 = vmatprep.mubr.f32.mxu0 0.0
  %285 = vmatmul.mubr.f32.gmra.mrb[0].mxu0 %v189
  %v286 = vpop.f32.mrb[0].mxu0
  %v287 = vadd.f32 %v157, %v286
  %v288 = vpop.f32.mrb[0].mxu0
  %289 = vmatprep.mubr.f32.mxu0 0.0
  %290 = vmatmul.mubr.f32.gmra.mrb[0].mxu0 %v192
  %v291 = vpop.f32.mrb[0].mxu0
  %v292 = vadd.f32 %v162, %v291
  %v293 = vpop.f32.mrb[0].mxu0
  %294 = vmatprep.mubr.f32.mxu0 0.0
  %295 = vmatmul.mubr.f32.gmra.mrb[0].mxu0 %v195
  %v296 = vpop.f32.mrb[0].mxu0
  %v297 = vadd.f32 %v167, %v296
  %v298 = vpop.f32.mrb[0].mxu0
  %299 = vmatprep.mubr.f32.mxu0 0.0
  %300 = vmatmul.mubr.f32.gmra.mrb[0].mxu0 %v198
  %v301 = vpop.f32.mrb[0].mxu0
  %v302 = vadd.f32 %v172, %v301
  %v303 = vpop.f32.mrb[0].mxu0
  %304 = vdwg.mxu0
  %v305 = vld [vmem:[%s4] sm:$0x1]
  %v307 = vlaneseq
  %v308 = vshrl.u32 %v307, 7
  %v309 = vsub.s32 0, %v308
  %v310 = vrot.slane %v305, %v309
  %v312 = vadd.f32 %v267, %v310
  %v313 = vadd.f32 %v272, %v310
  %v314 = vadd.f32 %v277, %v310
  %v315 = vadd.f32 %v282, %v310
  %v316 = vadd.f32 %v287, %v310
  %v317 = vadd.f32 %v292, %v310
  %v318 = vadd.f32 %v297, %v310
  %v319 = vadd.f32 %v302, %v310
  %v320 = vmax.f32 %v312, 0.0
  %v321 = vmax.f32 %v313, 0.0
  %v322 = vmax.f32 %v314, 0.0
  %v323 = vmax.f32 %v315, 0.0
  %v324 = vmax.f32 %v316, 0.0
  %v325 = vmax.f32 %v317, 0.0
  %v326 = vmax.f32 %v318, 0.0
  %v327 = vmax.f32 %v319, 0.0
  %v328 = vld [vmem:[%s5] sm:$0xff]
  %v329 = vld [vmem:[%s5 + $0x8] sm:$0xff]
  %v330 = vld [vmem:[%s5 + $0x10] sm:$0xff]
  %v331 = vld [vmem:[%s5 + $0x18] sm:$0xff]
  %v332 = vld [vmem:[%s5 + $0x20] sm:$0xff]
  %v333 = vld [vmem:[%s5 + $0x28] sm:$0xff]
  %v334 = vld [vmem:[%s5 + $0x30] sm:$0xff]
  %v335 = vld [vmem:[%s5 + $0x38] sm:$0xff]
  %v336 = vld [vmem:[%s6] sm:$0x1]
  %v338 = vlaneseq
  %v339 = vshrl.u32 %v338, 7
  %v340 = vsub.s32 0, %v339
  %v341 = vrot.slane %v336, %v340
  %vm343 = vcmask 523264
  %v345 = vsel %vm343, %v320, 0
  %v348 = vsel %vm343, %v321, 0
  %v351 = vsel %vm343, %v322, 0
  %v354 = vsel %vm343, %v323, 0
  %v357 = vsel %vm343, %v324, 0
  %v360 = vsel %vm343, %v325, 0
  %v363 = vsel %vm343, %v326, 0
  %v366 = vsel %vm343, %v327, 0
  %368 = vmatprep.subr.mxu0 0.0
  %369 = vmatpush1.msra.mxu0 %v328
  %370 = vmatprep.subr.mxu0 0.0
  %371 = vmatpush1.msra.mxu0 %v329
  %372 = vmatprep.subr.mxu0 0.0
  %373 = vmatpush1.msra.mxu0 %v330
  %374 = vmatprep.subr.mxu0 0.0
  %375 = vmatpush1.msra.mxu0 %v331
  %376 = vmatprep.subr.mxu0 0.0
  %377 = vmatpush1.msra.mxu0 %v332
  %378 = vmatprep.subr.mxu0 0.0
  %379 = vmatpush1.msra.mxu0 %v333
  %380 = vmatprep.subr.mxu0 0.0
  %381 = vmatpush1.msra.mxu0 %v334
  %382 = vmatprep.subr.mxu0 0.0
  %383 = vmatpush1.msra.mxu0 %v335
  %384 = vmatprep.subr.mxu0 0.0
  %385 = vmatpush1.msra.mxu0 0.0
  %386 = vmatprep.subr.mxu0 0.0
  %387 = vmatpush1.msra.mxu0 0.0
  %388 = vmatprep.subr.mxu0 0.0
  %389 = vmatpush1.msra.mxu0 0.0
  %390 = vmatprep.subr.mxu0 0.0
  %391 = vmatpush1.msra.mxu0 0.0
  %392 = vmatprep.subr.mxu0 0.0
  %393 = vmatpush1.msra.mxu0 0.0
  %394 = vmatprep.subr.mxu0 0.0
  %395 = vmatpush1.msra.mxu0 0.0
  %396 = vmatprep.subr.mxu0 0.0
  %397 = vmatpush1.msra.mxu0 0.0
  %398 = vmatprep.subr.mxu0 0.0
  %399 = vmatpush1.msra.mxu0 0.0
  %400 = vmatprep.subr.mxu0 0.0
  %401 = vmatpush1.msra.mxu0 0.0
  %402 = vmatprep.subr.mxu0 0.0
  %403 = vmatpush1.msra.mxu0 0.0
  %404 = vmatprep.subr.mxu0 0.0
  %405 = vmatpush1.msra.mxu0 0.0
  %406 = vmatprep.subr.mxu0 0.0
  %407 = vmatpush1.msra.mxu0 0.0
  %408 = vmatprep.subr.mxu0 0.0
  %409 = vmatpush1.msra.mxu0 0.0
  %410 = vmatprep.subr.mxu0 0.0
  %411 = vmatpush1.msra.mxu0 0.0
  %412 = vmatprep.subr.mxu0 0.0
  %413 = vmatpush1.msra.mxu0 0.0
  %414 = vmatprep.subr.mxu0 0.0
  %415 = vmatpush1.msra.mxu0 0.0
  %416 = vmatprep.subr.mxu0 0.0
  %417 = vmatpush1.msra.mxu0 0.0
  %418 = vmatprep.subr.mxu0 0.0
  %419 = vmatpush1.msra.mxu0 0.0
  %420 = vmatprep.subr.mxu0 0.0
  %421 = vmatpush1.msra.mxu0 0.0
  %422 = vmatprep.subr.mxu0 0.0
  %423 = vmatpush1.msra.mxu0 0.0
  %424 = vmatprep.subr.mxu0 0.0
  %425 = vmatpush1.msra.mxu0 0.0
  %426 = vmatprep.subr.mxu0 0.0
  %427 = vmatpush1.msra.mxu0 0.0
  %428 = vmatprep.subr.mxu0 0.0
  %429 = vmatpush1.msra.mxu0 0.0
  %430 = vmatprep.subr.mxu0 0.0
  %431 = vmatpush1.msra.mxu0 0.0
  %432 = vmatprep.mubr.f32.mxu0 0.0
  %433 = vmatmul.mubr.f32.gmra.mrb[0].mxu0 %v345
  %v434 = vpop.f32.mrb[0].mxu0
  %v435 = vadd.f32 %v341, %v434
  %v436 = vpop.f32.mrb[0].mxu0
  %437 = vmatprep.mubr.f32.mxu0 0.0
  %438 = vmatmul.mubr.f32.gmra.mrb[0].mxu0 %v348
  %v439 = vpop.f32.mrb[0].mxu0
  %v440 = vadd.f32 %v341, %v439
  %v441 = vpop.f32.mrb[0].mxu0
  %442 = vmatprep.mubr.f32.mxu0 0.0
  %443 = vmatmul.mubr.f32.gmra.mrb[0].mxu0 %v351
  %v444 = vpop.f32.mrb[0].mxu0
  %v445 = vadd.f32 %v341, %v444
  %v446 = vpop.f32.mrb[0].mxu0
  %447 = vmatprep.mubr.f32.mxu0 0.0
  %448 = vmatmul.mubr.f32.gmra.mrb[0].mxu0 %v354
  %v449 = vpop.f32.mrb[0].mxu0
  %v450 = vadd.f32 %v341, %v449
  %v451 = vpop.f32.mrb[0].mxu0
  %452 = vmatprep.mubr.f32.mxu0 0.0
  %453 = vmatmul.mubr.f32.gmra.mrb[0].mxu0 %v357
  %v454 = vpop.f32.mrb[0].mxu0
  %v455 = vadd.f32 %v341, %v454
  %v456 = vpop.f32.mrb[0].mxu0
  %457 = vmatprep.mubr.f32.mxu0 0.0
  %458 = vmatmul.mubr.f32.gmra.mrb[0].mxu0 %v360
  %v459 = vpop.f32.mrb[0].mxu0
  %v460 = vadd.f32 %v341, %v459
  %v461 = vpop.f32.mrb[0].mxu0
  %462 = vmatprep.mubr.f32.mxu0 0.0
  %463 = vmatmul.mubr.f32.gmra.mrb[0].mxu0 %v363
  %v464 = vpop.f32.mrb[0].mxu0
  %v465 = vadd.f32 %v341, %v464
  %v466 = vpop.f32.mrb[0].mxu0
  %467 = vmatprep.mubr.f32.mxu0 0.0
  %468 = vmatmul.mubr.f32.gmra.mrb[0].mxu0 %v366
  %v469 = vpop.f32.mrb[0].mxu0
  %v470 = vadd.f32 %v341, %v469
  %v471 = vpop.f32.mrb[0].mxu0
  %472 = vdwg.mxu0
  %473 = vst.msk [vmem:[%s7] sm:$0xff] %vm175, %v435
  %474 = vst.msk [vmem:[%s7 + $0x8] sm:$0xff] %vm175, %v440
  %475 = vst.msk [vmem:[%s7 + $0x10] sm:$0xff] %vm175, %v445
  %476 = vst.msk [vmem:[%s7 + $0x18] sm:$0xff] %vm175, %v450
  %477 = vst.msk [vmem:[%s7 + $0x20] sm:$0xff] %vm175, %v455
  %478 = vst.msk [vmem:[%s7 + $0x28] sm:$0xff] %vm175, %v460
  %479 = vst.msk [vmem:[%s7 + $0x30] sm:$0xff] %vm175, %v465
  %480 = vst.msk [vmem:[%s7 + $0x38] sm:$0xff] %vm175, %v470
  // Predicated region
  $region30: #{tpu_custom_call.1} parent=0 // pred_check
    _
  $region31: #{tpu_custom_call.1} parent=0 // pred_check_branch
    %482 = sbr.rel (0) target = $region33
  $region32: #{tpu_custom_call.1} parent=0 // pred_region
    _
  $region33: #{tpu_custom_call.1} parent=0 // pred_fallthru
    _
  // Predicated region
  $region34: #{tpu_custom_call.1} parent=0 // pred_check
    _
  $region35: #{tpu_custom_call.1} parent=0 // pred_check_branch
    %484 = sbr.rel (0) target = $region37
  $region36: #{tpu_custom_call.1} parent=0 // pred_region
    _
  $region37: #{tpu_custom_call.1} parent=0 // pred_fallthru
    _

</llo_original>
